<compile_context>
chip_gen: v7x
topology: tpu7x:2x2x1
jax: 0.10.0
libtpu: 0.0.40
codegen_flags: <defaults>
</compile_context>

<pallas_src>
import functools

import jax
import jax.numpy as jnp
from jax.experimental import pallas as pl
from jax.experimental.pallas import tpu as pltpu


_LANES = 512          # lane-dense trailing axis (multiple of 128 and of C=4)
_ROW_BLOCK = 2048     # 2048 * 512 * 4 B = 4 MiB per f32 buffer


def _clip_boxes_kernel(boxes_ref, out_ref, *, width, num_coords,
                       lo_sentinel, hi_sentinel):
    # boxes_ref / out_ref: (row_block, LANES) lane-dense VMEM tile.
    x = boxes_ref[...]
    dtype = x.dtype
    lanes = x.shape[-1]

    # Hoisted (1, LANES) coordinate mask; broadcasts over sublanes below.
    lane = jax.lax.broadcasted_iota(jnp.int32, (1, lanes), dimension=1)
    if num_coords & (num_coords - 1) == 0:          # power of two -> cheap AND
        coord = lane & (num_coords - 1)
    else:
        coord = lane % num_coords

    lower = jnp.where(coord == 0,
                      jnp.asarray(0, dtype), jnp.asarray(lo_sentinel, dtype))
    upper = jnp.where(coord == 1,
                      jnp.asarray(width, dtype), jnp.asarray(hi_sentinel, dtype))

    # Per element: one max + one min (VALU); kernel stays purely HBM-bound.
    out_ref[...] = jnp.minimum(jnp.maximum(x, lower), upper)


def _choose_row_block(rows: int) -> int:
    """Pick a row block that is (8,128)-legal and yields >= 2 grid steps."""
    if rows <= 8:
        return rows                       # single full-extent block (legal)
    if rows >= 2 * _ROW_BLOCK:
        return _ROW_BLOCK                 # big input: 4 MiB blocks, many tiles
    # Medium input: split into ~2 tiles (multiple of 8 rows) so the "parallel"
    # grid axis can be sharded across v7x's two TensorCores.
    half = -(-rows // 2)
    half = ((half + 7) // 8) * 8
    return min(half, _ROW_BLOCK)


def clip_boxes(boxes: jax.Array, img: jax.Array, *,
               small_input_threshold: int = 1 << 16) -> jax.Array:
    """Pallas implementation of ClipBoxes.forward(boxes, img)."""
    if img.ndim == 4:
        _, _, width, _ = img.shape        # mirrors the PyTorch code exactly
    elif img.ndim == 3:
        _, _, width = img.shape
    else:
        raise NotImplementedError
    # TODO(synk): img.shape[2] in NCHW is really the height; kept as-is to
    # match the reference module's (odd-looking but specified) semantics.

    B, N, C = boxes.shape
    dtype = boxes.dtype

    if jnp.issubdtype(dtype, jnp.floating):
        lo_sentinel, hi_sentinel = -jnp.inf, jnp.inf
    elif jnp.issubdtype(dtype, jnp.integer):
        info = jnp.iinfo(dtype)
        lo_sentinel, hi_sentinel = int(info.min), int(info.max)
    else:
        raise TypeError(f"unsupported boxes dtype: {dtype}")

    total = B * N * C

    # Tiny inputs (or exotic C): a fused XLA elementwise is strictly faster
    # than pallas_call launch + layout plumbing.
    if total < small_input_threshold or _LANES % C != 0:
        out = boxes.at[:, :, 0].set(jnp.maximum(boxes[:, :, 0], 0))
        return out.at[:, :, 1].set(jnp.minimum(out[:, :, 1], width))

    rows = pl.cdiv(total, _LANES)
    row_block = _choose_row_block(rows)
    num_tiles = pl.cdiv(rows, row_block)

    # Lane-dense slab.  Coordinate index == flat index % C because reshape(-1)
    # is row-major and the coordinate axis is the fastest-varying axis.
    zero_copy = (total % _LANES == 0)
    if zero_copy:
        tiled = boxes.reshape(rows, _LANES)               # pure view, no copy
    else:
        flat = boxes.reshape(-1)
        flat = jnp.pad(flat, (0, rows * _LANES - total))  # pad to LANES mult only
        tiled = flat.reshape(rows, _LANES)

    kernel = functools.partial(
        _clip_boxes_kernel, width=width, num_coords=C,
        lo_sentinel=lo_sentinel, hi_sentinel=hi_sentinel)

    out = pl.pallas_call(
        kernel,
        out_shape=jax.ShapeDtypeStruct((rows, _LANES), dtype),
        grid=(num_tiles,),
        in_specs=[pl.BlockSpec((row_block, _LANES), lambda i: (i, 0))],
        out_specs=pl.BlockSpec((row_block, _LANES), lambda i: (i, 0)),
        input_output_aliases={0: 0},        # in-place clamp, reuse HBM buffer
        compiler_params=pltpu.CompilerParams(
            dimension_semantics=("parallel",)),
    )(tiled)

    if zero_copy:
        return out.reshape(B, N, C)
    return out.reshape(-1)[:total].reshape(B, N, C)


if __name__ == "__main__":
    key = jax.random.PRNGKey(0)
    k1, k2, k3, k4 = jax.random.split(key, 4)

    img = jax.random.normal(k4, (2, 4, 16, 16), dtype=jnp.float32)  # NCHW
    width = img.shape[2]

    def ref(b):
        r = b.at[:, :, 0].set(jnp.maximum(b[:, :, 0], 0.0))
        return r.at[:, :, 1].set(jnp.minimum(r[:, :, 1], float(width)))

    # 1) Tiny input -> fused-jnp escape hatch.
    small = jax.random.uniform(k1, (2, 8, 4), jnp.float32,
                               minval=-10.0, maxval=30.0)
    out_small = jax.block_until_ready(clip_boxes(small, img))
    assert jnp.allclose(out_small, ref(small)), "small-path mismatch"

    # 2) Medium input, total divisible by 512 and by the row block
    #    -> zero-copy Pallas path, 2 grid steps (megacore-shardable).
    med = jax.random.uniform(k2, (2, 4096, 4), jnp.float32,
                             minval=-10.0, maxval=30.0)
    out_med = jax.block_until_ready(
        clip_boxes(med, img, small_input_threshold=0))
    assert jnp.allclose(out_med, ref(med)), "zero-copy path mismatch"

    # 3) Zero-copy path with a partial last row-block (rows=36, block=24):
    #    exercises Pallas OOB masking on the trailing block.
    part = jax.random.uniform(k3, (2, 2304, 4), jnp.float32,
                              minval=-10.0, maxval=30.0)
    out_part = jax.block_until_ready(
        clip_boxes(part, img, small_input_threshold=0))
    assert jnp.allclose(out_part, ref(part)), "partial-block path mismatch"

    # 4) total not divisible by 512 -> small-pad Pallas path.
    odd = jax.random.uniform(k1, (1, 300, 4), jnp.float32,
                             minval=-10.0, maxval=30.0)
    out_odd = jax.block_until_ready(
        clip_boxes(odd, img, small_input_threshold=0))
    assert jnp.allclose(out_odd, ref(odd)), "padded path mismatch"

    print("KERNEL_OK")
</pallas_src>

<mosaic_0001>
module attributes {stable_mosaic.version = 11 : i64} {
  func.func @_clip_boxes_kernel(%arg0: i32, %arg1: memref<32x512xf32, #tpu.memory_space<vmem>>, %arg2: memref<32x512xf32, #tpu.memory_space<vmem>>) attributes {dimension_semantics = [#tpu.dimension_semantics<parallel>], iteration_bounds = array<i64: 2>, scalar_prefetch = 0 : i64, scratch_operands = 0 : i64, tpu.core_type = #tpu.core_type<tc>, window_params = [{transform_indices = @transform_0, window_bounds = array<i64: 32, 512>}, {transform_indices = @transform_1, window_bounds = array<i64: 32, 512>}]} {
    %c0 = arith.constant 0 : index
    %c0_0 = arith.constant 0 : index
    %0 = vector.load %arg1[%c0, %c0_0] : memref<32x512xf32, #tpu.memory_space<vmem>>, vector<32x512xf32>
    %1 = tpu.iota {dimensions = array<i32: 1>} : vector<1x512xi32>
    %c3_i32 = arith.constant 3 : i32
    %2 = vector.broadcast %c3_i32 : i32 to vector<1x512xi32>
    %3 = arith.andi %1, %2 : vector<1x512xi32>
    %c0_i32 = arith.constant 0 : i32
    %4 = vector.broadcast %c0_i32 : i32 to vector<1x512xi32>
    %5 = arith.cmpi eq, %3, %4 : vector<1x512xi32>
    %cst = arith.constant 0.000000e+00 : f32
    %cst_1 = arith.constant 0xFF800000 : f32
    %6 = vector.broadcast %cst : f32 to vector<1x512xf32>
    %7 = vector.broadcast %cst_1 : f32 to vector<1x512xf32>
    %8 = arith.select %5, %6, %7 : vector<1x512xi1>, vector<1x512xf32>
    %c1_i32 = arith.constant 1 : i32
    %9 = vector.broadcast %c1_i32 : i32 to vector<1x512xi32>
    %10 = arith.cmpi eq, %3, %9 : vector<1x512xi32>
    %cst_2 = arith.constant 1.600000e+01 : f32
    %cst_3 = arith.constant 0x7F800000 : f32
    %11 = vector.broadcast %cst_2 : f32 to vector<1x512xf32>
    %12 = vector.broadcast %cst_3 : f32 to vector<1x512xf32>
    %13 = arith.select %10, %11, %12 : vector<1x512xi1>, vector<1x512xf32>
    %14 = vector.broadcast %8 : vector<1x512xf32> to vector<32x512xf32>
    %15 = arith.maximumf %0, %14 : vector<32x512xf32>
    %16 = vector.broadcast %13 : vector<1x512xf32> to vector<32x512xf32>
    %17 = arith.minimumf %15, %16 : vector<32x512xf32>
    %c0_4 = arith.constant 0 : index
    %c0_5 = arith.constant 0 : index
    %18 = vector.load %arg2[%c0_4, %c0_5] : memref<32x512xf32, #tpu.memory_space<vmem>>, vector<32x512xf32>
    tpu.vector_store %arg2[%c0_4, %c0_5], %17 {strides = array<i32>} : memref<32x512xf32, #tpu.memory_space<vmem>>, vector<32x512xf32>,
    return
  }
  func.func @transform_0(%arg0: i32) -> (i32, i32) {
    %c0_i32 = arith.constant 0 : i32
    %c0_i32_0 = arith.constant 0 : i32
    return %arg0, %c0_i32 : i32, i32
  }
  func.func @transform_1(%arg0: i32) -> (i32, i32) {
    %c0_i32 = arith.constant 0 : i32
    %c0_i32_0 = arith.constant 0 : i32
    return %arg0, %c0_i32 : i32, i32
  }
}

</mosaic_0001>

<llo_original>
// kernel: tpu_custom_call.1
$region0: #{tpu_custom_call.1}
  #allocation0 [shape = 'u32[]', space=smem, size = 0x4, offset = 0x4, fixed_abs, tag = 'smem constant byte address 0x4 - core index']
  #allocation1 [shape = 'u32[144,128]{1,0:T(1,128)}', space=vmem, size = 0x12000, scoped, tag = 'internal scratch']
  %s0 = inlined_call_operand.hbm [shape: f32[64,512], index: 0, kind: input, shape index: {}, may-alias: {0,1}]
  %s1 = inlined_call_operand.hbm [shape: f32[64,512], index: 1, kind: output, shape index: {}, may-alias: {0,1}]
  %s2 = sld [smem:[#allocation0]]
  $region41: #{tpu_custom_call.1} parent=0
    _
  %s4 = ssub.s32 1, %s2
  %s5 = scalar_select 0, %s4, %s2
  $region1: #{tpu_custom_call.1} parent=0
    #allocation2 [shape = 'u8[131072]{0}', space=vmem, size = 0x20000, scoped, tag = 'input window, operand 0']
    #allocation3 [shape = 's32[2]{0}', space=sflag, size = 0x8, scoped, tag = 'scoped memory for tpu_custom_call.1']
    #allocation4 [shape = 's32[2]{0}', space=sflag, size = 0x8, scoped, tag = 'scoped memory for tpu_custom_call.1']
    #allocation5 [shape = 'u8[131072]{0}', space=vmem, size = 0x20000, scoped, tag = 'output window, operand 0']
    %6 = vsyncpa [#allocation3], 0
    %s7 = scalar_lea.sflag [#allocation3], 1
    %8 = vsyncpa %s7, 0
    %9 = vsyncpa [#allocation4], 0
    %s10 = scalar_lea.sflag [#allocation4], 1
    %11 = vsyncpa %s10, 0
    loop: start=0, step=1, limit=4
    $region2: #{tpu_custom_call.1} parent=1 // loop_pre_header
      _
    $region3: #{tpu_custom_call.1} parent=1 // loop_header
      %s13 = sphi 0, %s17
      %p14 = scmp.ge.s32.totalorder %s13, 4
      %s23 = sphi 0, %s25
      %s26 = sphi 0, %s23
      %s27 = sphi 0, %s26
      %s43 = sphi 0, %s27
      %s49 = sphi 0, %s51
      %s52 = sphi 0, %s49
      %s53 = sphi 0, %s52
      %s69 = sphi 0, %s53
    $region4: #{tpu_custom_call.1} parent=1 // loop_header_branch
      %16 = sbr.rel (%p14) target = $region8
    $region5: #{tpu_custom_call.1} parent=1 // loop_body
      %s18 = ssub.s32 %s13, 1
      %s19 = ssub.s32 %s13, 2
      %s20 = sadd.s32 %s13, 1
      %s21 = ssub.s32 %s13, %s20
      %p22 = scmp.eq.s32.totalorder %s21, 0
      %s24 = sadd.s32 %s23, 1
      %s25 = scalar_select %p22, %s23, %s24
      %p28 = pneg %p22
      %p29 = scmp.eq.s32.totalorder %s13, 1
      %p30 = por %p28, %p29
      %p31 = scmp.ne.s32.totalorder %s23, %s26
      %p32 = scmp.eq.s32.totalorder %s13, 0
      %p33 = por %p31, %p32
      %p34 = scmp.ne.s32.totalorder %s23, %s26
      %p35 = scmp.eq.s32.totalorder %s18, 1
      %p36 = por %p34, %p35
      %p37 = scmp.ne.s32.totalorder %s26, %s27
      %p38 = scmp.eq.s32.totalorder %s18, 0
      %p39 = por %p37, %p38
      %p40 = scmp.ne.s32.totalorder %s26, %s27
      %p41 = scmp.eq.s32.totalorder %s19, 1
      %p42 = por %p40, %p41
      %p44 = scmp.ne.s32.totalorder %s27, %s43
      %p45 = scmp.eq.s32.totalorder %s19, 0
      %p46 = por %p44, %p45
      %s47 = ssub.s32 %s13, %s20
      %p48 = scmp.eq.s32.totalorder %s47, 0
      %s50 = sadd.s32 %s49, 1
      %s51 = scalar_select %p48, %s49, %s50
      %p54 = pneg %p48
      %p55 = scmp.eq.s32.totalorder %s13, 1
      %p56 = por %p54, %p55
      %p57 = scmp.ne.s32.totalorder %s49, %s52
      %p58 = scmp.eq.s32.totalorder %s13, 0
      %p59 = por %p57, %p58
      %p60 = scmp.ne.s32.totalorder %s49, %s52
      %p61 = scmp.eq.s32.totalorder %s18, 1
      %p62 = por %p60, %p61
      %p63 = scmp.ne.s32.totalorder %s52, %s53
      %p64 = scmp.eq.s32.totalorder %s18, 0
      %p65 = por %p63, %p64
      %p66 = scmp.ne.s32.totalorder %s52, %s53
      %p67 = scmp.eq.s32.totalorder %s19, 1
      %p68 = por %p66, %p67
      %p70 = scmp.ne.s32.totalorder %s53, %s69
      %p71 = scmp.eq.s32.totalorder %s19, 0
      %p72 = por %p70, %p71
      %p73 = scmp.le.s32.totalorder 1, %s13
      %p74 = scmp.lt.s32.totalorder %s13, 3
      %p75 = pnand %p73, %p74
      %p76 = pneg %p75
      // Predicated region
      $region9: #{tpu_custom_call.1} parent=5 // pred_check
        _
      $region10: #{tpu_custom_call.1} parent=5 // pred_check_branch
        %78 = sbr.rel (%p75) target = $region12
      $region11: #{tpu_custom_call.1} parent=5 // pred_region
        %s79 = ssub.s32 %s13, 1
      $region12: #{tpu_custom_call.1} parent=5 // pred_fallthru
        _
      %p80 = scmp.lt.s32.totalorder %s13, 2
      // Predicated region
      $region13: #{tpu_custom_call.1} parent=5 // pred_check
        %p81 = pneg %p80
      $region14: #{tpu_custom_call.1} parent=5 // pred_check_branch
        %83 = sbr.rel (%p81) target = $region16
      $region15: #{tpu_custom_call.1} parent=5 // pred_region
        // Predicated region
        $region17: #{tpu_custom_call.1} parent=15 // pred_check
          %p84 = pneg %p33
        $region18: #{tpu_custom_call.1} parent=15 // pred_check_branch
          %86 = sbr.rel (%p84) target = $region20
        $region19: #{tpu_custom_call.1} parent=15 // pred_region
          %s87 = sand.u32 %s23, 1
          %s88 = scalar_lea.sflag [#allocation3], %s87
          %s89 = sand.u32 %s23, 1
          %s90 = smul.addr %s89, 128
          %s91 = scalar_lea.vmem [#allocation2], %s90
          %s92 = smul.u32 4, %s13
          %s94 = ssub.s32 2048, 2048
          %95 = vsyncadd %s88, %s94
          %s96 = smul.addr %s92, 4
          %s97 = smul.addr %s96, 128
          %s98 = scalar_lea.hbm %s0, %s97
          %s99 = sshll.u32 %s91, 4
          %s100 = int_to_ptr.vmem [resolvable:$true] %s99
          %105 = dma.hbm_to_vmem [thread:$0]  %s98, 2048, %s100, %s88, 512, 512, 32
        $region20: #{tpu_custom_call.1} parent=15 // pred_fallthru
          _
      $region16: #{tpu_custom_call.1} parent=5 // pred_fallthru
        _
      %p106 = scmp.le.s32.totalorder 1, %s13
      %p107 = scmp.lt.s32.totalorder %s13, 3
      %p108 = pnand %p106, %p107
      %p109 = pneg %p108
      // Predicated region
      $region21: #{tpu_custom_call.1} parent=5 // pred_check
        _
      $region22: #{tpu_custom_call.1} parent=5 // pred_check_branch
        %111 = sbr.rel (%p108) target = $region24
      $region23: #{tpu_custom_call.1} parent=5 // pred_region
        %s112 = ssub.s32 %s13, 1
        %s113 = sand.u32 %s26, 1
        %s114 = scalar_lea.sflag [#allocation3], %s113
        %s115 = sand.u32 %s26, 1
        %s116 = smul.addr %s115, 128
        %s117 = scalar_lea.vmem [#allocation2], %s116
        // Predicated region
        $region25: #{tpu_custom_call.1} parent=23 // pred_check
          %p118 = pneg %p39
        $region26: #{tpu_custom_call.1} parent=23 // pred_check_branch
          %120 = sbr.rel (%p118) target = $region28
        $region27: #{tpu_custom_call.1} parent=23 // pred_region
          %121 = dma.done %s114, 2048
        $region28: #{tpu_custom_call.1} parent=23 // pred_fallthru
          _
        %s122 = sand.u32 %s26, 1
        %s123 = scalar_lea.sflag [#allocation3], %s122
        %s124 = sand.u32 %s26, 1
        %s125 = smul.addr %s124, 128
        %s126 = scalar_lea.vmem [#allocation2], %s125
        %p127 = pneg %p39
        %p128 = pneg %p36
        %p129 = pneg %p65
        %p130 = pneg %p62
        %s131 = sand.u32 %s52, 1
        %s132 = scalar_lea.sflag [#allocation4], %s131
        %s133 = sand.u32 %s52, 1
        %s134 = smul.addr %s133, 128
        %s135 = scalar_lea.vmem [#allocation5], %s134
        %s136 = smul.u32 4, %s18
        %s137 = smul.u32 4, %s18
        %v138 = vld [vmem:[%s117] sm:$0xff]
        %v139 = vld [vmem:[%s117 + $0x8] sm:$0xff]
        %v140 = vld [vmem:[%s117 + $0x10] sm:$0xff]
        %v141 = vld [vmem:[%s117 + $0x18] sm:$0xff]
        %v142 = vld [vmem:[%s117 + $0x20] sm:$0xff]
        %v143 = vld [vmem:[%s117 + $0x28] sm:$0xff]
        %v144 = vld [vmem:[%s117 + $0x30] sm:$0xff]
        %v145 = vld [vmem:[%s117 + $0x38] sm:$0xff]
        %v146 = vld [vmem:[%s117 + $0x40] sm:$0xff]
        %v147 = vld [vmem:[%s117 + $0x48] sm:$0xff]
        %v148 = vld [vmem:[%s117 + $0x50] sm:$0xff]
        %v149 = vld [vmem:[%s117 + $0x58] sm:$0xff]
        %v150 = vld [vmem:[%s117 + $0x60] sm:$0xff]
        %v151 = vld [vmem:[%s117 + $0x68] sm:$0xff]
        %v152 = vld [vmem:[%s117 + $0x70] sm:$0xff]
        %v153 = vld [vmem:[%s117 + $0x78] sm:$0xff]
        %v154 = vlaneseq
        %v155 = vand.u32 %v154, 127
        %v156 = vadd.s32 %v155, 128
        %v157 = vadd.s32 %v155, 256
        %v158 = vadd.s32 %v155, 384
        %v159 = vand.u32 %v155, 3
        %v160 = vand.u32 %v156, 3
        %v161 = vand.u32 %v157, 3
        %v162 = vand.u32 %v158, 3
        %vm163 = vcmp.eq.s32.totalorder %v159, 0
        %vm164 = vcmp.eq.s32.totalorder %v160, 0
        %vm165 = vcmp.eq.s32.totalorder %v161, 0
        %vm166 = vcmp.eq.s32.totalorder %v162, 0
        %v167 = vsel %vm163, 0.0, -inf
        %v168 = vsel %vm164, 0.0, -inf
        %v169 = vsel %vm165, 0.0, -inf
        %v170 = vsel %vm166, 0.0, -inf
        %vm171 = vcmp.eq.s32.totalorder %v159, 1
        %vm172 = vcmp.eq.s32.totalorder %v160, 1
        %vm173 = vcmp.eq.s32.totalorder %v161, 1
        %vm174 = vcmp.eq.s32.totalorder %v162, 1
        %v175 = vsel %vm171, 16.0, inf
        %v176 = vsel %vm172, 16.0, inf
        %v177 = vsel %vm173, 16.0, inf
        %v178 = vsel %vm174, 16.0, inf
        %v179 = vmax.f32 %v138, %v167
        %v180 = vmax.f32 %v139, %v168
        %v181 = vmax.f32 %v140, %v169
        %v182 = vmax.f32 %v141, %v170
        %v183 = vmax.f32 %v142, %v167
        %v184 = vmax.f32 %v143, %v168
        %v185 = vmax.f32 %v144, %v169
        %v186 = vmax.f32 %v145, %v170
        %v187 = vmax.f32 %v146, %v167
        %v188 = vmax.f32 %v147, %v168
        %v189 = vmax.f32 %v148, %v169
        %v190 = vmax.f32 %v149, %v170
        %v191 = vmax.f32 %v150, %v167
        %v192 = vmax.f32 %v151, %v168
        %v193 = vmax.f32 %v152, %v169
        %v194 = vmax.f32 %v153, %v170
        %v195 = vmin.f32 %v179, %v175
        %v196 = vmin.f32 %v180, %v176
        %v197 = vmin.f32 %v181, %v177
        %v198 = vmin.f32 %v182, %v178
        %v199 = vmin.f32 %v183, %v175
        %v200 = vmin.f32 %v184, %v176
        %v201 = vmin.f32 %v185, %v177
        %v202 = vmin.f32 %v186, %v178
        %v203 = vmin.f32 %v187, %v175
        %v204 = vmin.f32 %v188, %v176
        %v205 = vmin.f32 %v189, %v177
        %v206 = vmin.f32 %v190, %v178
        %v207 = vmin.f32 %v191, %v175
        %v208 = vmin.f32 %v192, %v176
        %v209 = vmin.f32 %v193, %v177
        %v210 = vmin.f32 %v194, %v178
        %211 = vst [vmem:[%s135] sm:$0xff] %v195
        %212 = vst [vmem:[%s135 + $0x8] sm:$0xff] %v196
        %213 = vst [vmem:[%s135 + $0x10] sm:$0xff] %v197
        %214 = vst [vmem:[%s135 + $0x18] sm:$0xff] %v198
        %215 = vst [vmem:[%s135 + $0x20] sm:$0xff] %v199
        %216 = vst [vmem:[%s135 + $0x28] sm:$0xff] %v200
        %217 = vst [vmem:[%s135 + $0x30] sm:$0xff] %v201
        %218 = vst [vmem:[%s135 + $0x38] sm:$0xff] %v202
        %219 = vst [vmem:[%s135 + $0x40] sm:$0xff] %v203
        %220 = vst [vmem:[%s135 + $0x48] sm:$0xff] %v204
        %221 = vst [vmem:[%s135 + $0x50] sm:$0xff] %v205
        %222 = vst [vmem:[%s135 + $0x58] sm:$0xff] %v206
        %223 = vst [vmem:[%s135 + $0x60] sm:$0xff] %v207
        %224 = vst [vmem:[%s135 + $0x68] sm:$0xff] %v208
        %225 = vst [vmem:[%s135 + $0x70] sm:$0xff] %v209
        %226 = vst [vmem:[%s135 + $0x78] sm:$0xff] %v210
        %s227 = sand.u32 %s52, 1
        %s228 = scalar_lea.sflag [#allocation4], %s227
        %s229 = sand.u32 %s52, 1
        %s230 = smul.addr %s229, 128
        %s231 = scalar_lea.vmem [#allocation5], %s230
        // Predicated region
        $region29: #{tpu_custom_call.1} parent=23 // pred_check
          %p232 = pneg %p62
        $region30: #{tpu_custom_call.1} parent=23 // pred_check_branch
          %234 = sbr.rel (%p232) target = $region32
        $region31: #{tpu_custom_call.1} parent=23 // pred_region
          %s235 = smul.u32 4, %s18
          %s237 = ssub.s32 2048, 2048
          %238 = vsyncadd %s228, %s237
          %s239 = smul.addr %s235, 4
          %s240 = smul.addr %s239, 128
          %s241 = scalar_lea.hbm %s1, %s240
          %s242 = sshll.u32 %s231, 4
          %s243 = int_to_ptr.vmem [resolvable:$true] %s242
          %248 = dma.vmem_to_hbm [thread:$0]  %s243, 2048, %s241, %s228, 512, 512, 32
        $region32: #{tpu_custom_call.1} parent=23 // pred_fallthru
          _
      $region24: #{tpu_custom_call.1} parent=5 // pred_fallthru
        _
      %p249 = scmp.le.s32.totalorder 2, %s13
      // Predicated region
      $region33: #{tpu_custom_call.1} parent=5 // pred_check
        %p250 = pneg %p249
      $region34: #{tpu_custom_call.1} parent=5 // pred_check_branch
        %252 = sbr.rel (%p250) target = $region36
      $region35: #{tpu_custom_call.1} parent=5 // pred_region
        %s253 = ssub.s32 %s13, 2
        // Predicated region
        $region37: #{tpu_custom_call.1} parent=35 // pred_check
          %p254 = pneg %p68
        $region38: #{tpu_custom_call.1} parent=35 // pred_check_branch
          %256 = sbr.rel (%p254) target = $region40
        $region39: #{tpu_custom_call.1} parent=35 // pred_region
          %s257 = sand.u32 %s53, 1
          %s258 = scalar_lea.sflag [#allocation4], %s257
          %s259 = sand.u32 %s53, 1
          %s260 = smul.addr %s259, 128
          %s261 = scalar_lea.vmem [#allocation5], %s260
          %262 = dma.done %s258, 2048
        $region40: #{tpu_custom_call.1} parent=35 // pred_fallthru
          _
      $region36: #{tpu_custom_call.1} parent=5 // pred_fallthru
        _
    $region6: #{tpu_custom_call.1} parent=1 // loop_footer
      %s17 = sadd.s32 1, %s13
    $region7: #{tpu_custom_call.1} parent=1 // loop_footer_branch
      %12 = sbr.rel target = $region3
    $region8: #{tpu_custom_call.1} parent=1 // loop_exit
      _
    %263 = vsyncpa [#allocation3], 1
    %s264 = scalar_lea.sflag [#allocation3], 1
    %265 = vsyncpa %s264, 1
    %266 = vsyncpa [#allocation4], 1
    %s267 = scalar_lea.sflag [#allocation4], 1
    %268 = vsyncpa %s267, 1

</llo_original>
